<compile_context>
chip_gen: v5e
topology: v5e:2x2
jax: 0.10.0
libtpu: 0.0.40
codegen_flags: <defaults>
</compile_context>

<pallas_src>
import functools

import jax
import jax.numpy as jnp
from jax import lax
from jax.experimental import pallas as pl
from jax.experimental.pallas import tpu as pltpu


def adapter_kernel(x_ref, wd_ref, bd_ref, wu_ref, bu_ref, o_ref):
    # x_ref:  (tm, c_in)        activation row tile
    # wd_ref: (hidden, c_in)    down_proj.weight (PyTorch layout: out_features, in_features)
    # bd_ref: (1, hidden)
    # wu_ref: (c_in, hidden)    up_proj.weight
    # bu_ref: (1, c_in)
    x = x_ref[...]

    # down_proj: x @ wd.T -> (tm, hidden). Both operands stay in the input dtype (native
    # bf16 MXU for bf16 models); accumulate in fp32.
    h = lax.dot_general(
        x, wd_ref[...],
        dimension_numbers=(((1,), (1,)), ((), ())),
        preferred_element_type=jnp.float32,
    ) + bd_ref[...].astype(jnp.float32)

    # ReLU
    h = jnp.maximum(h, 0.0)

    # Dropout(p=0.1) evaluated in inference mode => identity.
    # TODO(synk): training-mode dropout (stateful PRNG mask + 1/(1-p) scaling) not implemented.

    # up_proj: h @ wu.T -> (tm, c_in). Cast h back to the input dtype (no-op for fp32,
    # halves MXU cost and vreg footprint for bf16); accumulate in fp32.
    out = lax.dot_general(
        h.astype(x.dtype), wu_ref[...],
        dimension_numbers=(((1,), (1,)), ((), ())),
        preferred_element_type=jnp.float32,
    ) + bu_ref[...].astype(jnp.float32)

    o_ref[...] = out.astype(o_ref.dtype)


def _round_up(a, b):
    return (a + b - 1) // b * b


def _vmem_capacity_bytes():
    try:
        return int(pltpu.get_tpu_info().vmem_capacity_bytes)
    except Exception:
        return 64 << 20  # conservative (v7x per-TC size)


_VMEM_CAPACITY = _vmem_capacity_bytes()


def _probe_single_buffer_weights():
    """One-time probe: does this build accept/lower pipeline_mode=pl.Buffered(1) on a
    constant-index BlockSpec? Runs a tiny kernel once at import."""
    try:
        def k(x_ref, w_ref, o_ref):
            o_ref[...] = x_ref[...] + w_ref[...]

        out = pl.pallas_call(
            k,
            out_shape=jax.ShapeDtypeStruct((16, 128), jnp.float32),
            grid_spec=pltpu.PrefetchScalarGridSpec(
                num_scalar_prefetch=0,
                grid=(2,),
                in_specs=[
                    pl.BlockSpec((8, 128), lambda i: (i, 0)),
                    pl.BlockSpec((8, 128), lambda i: (0, 0),
                                 pipeline_mode=pl.Buffered(1)),
                ],
                out_specs=pl.BlockSpec((8, 128), lambda i: (i, 0)),
            ),
        )(jnp.zeros((16, 128), jnp.float32), jnp.zeros((8, 128), jnp.float32))
        jax.block_until_ready(out)
        return True
    except Exception:
        return False


_SINGLE_BUFFER_WEIGHTS = _probe_single_buffer_weights()


def _adapter_call(x2, wd, bd2, wu, bu2, *, tm, grid_m, vmem_limit, single_buffer_weights):
    M, c_in = x2.shape
    hidden = wd.shape[0]
    # Constant-index (never re-DMA'd) params: single-buffer them to save VMEM when supported.
    w_kwargs = {"pipeline_mode": pl.Buffered(1)} if single_buffer_weights else {}

    in_specs = [
        pl.BlockSpec((tm, c_in), lambda i: (i, 0)),
        pl.BlockSpec((hidden, c_in), lambda i: (0, 0), **w_kwargs),
        pl.BlockSpec((1, hidden), lambda i: (0, 0), **w_kwargs),
        pl.BlockSpec((c_in, hidden), lambda i: (0, 0), **w_kwargs),
        pl.BlockSpec((1, c_in), lambda i: (0, 0), **w_kwargs),
    ]

    return pl.pallas_call(
        adapter_kernel,
        out_shape=jax.ShapeDtypeStruct((M, c_in), x2.dtype),
        grid_spec=pltpu.PrefetchScalarGridSpec(
            num_scalar_prefetch=0,
            grid=(grid_m,),
            in_specs=in_specs,
            out_specs=pl.BlockSpec((tm, c_in), lambda i: (i, 0)),
        ),
        compiler_params=pltpu.CompilerParams(
            dimension_semantics=("parallel",),  # shards the row axis across TCs on v7x
            vmem_limit_bytes=vmem_limit,
        ),
    )(x2, wd, bd2, wu, bu2)


@functools.partial(jax.jit, static_argnames=("tm",))
def adapter_forward(x, wd, bd, wu, bu, *, tm=None):
    """x: (..., c_in); wd: (hidden, c_in); bd: (hidden,); wu: (c_in, hidden); bu: (c_in,)."""
    orig_shape = x.shape
    c_in = x.shape[-1]
    hidden = wd.shape[0]

    x2 = x.reshape(-1, c_in)
    M = x2.shape[0]

    itemsize = jnp.dtype(x.dtype).itemsize
    sub = max(8, 32 // itemsize)  # sublane packing: 8 fp32, 16 bf16, 32 int8

    if tm is None:
        # Budget double-buffered x/out tiles plus the fp32 intermediates (h and the
        # pre-cast output accumulator) against a fraction of per-core VMEM:
        #   ~40 MiB on 128 MiB parts (v5e/v6e), ~16 MiB on 64 MiB parts (v7x).
        big_vmem = _VMEM_CAPACITY >= (100 << 20)
        tile_budget = (40 << 20) if big_vmem else (16 << 20)
        per_row = 4 * c_in * itemsize + 4 * (hidden + c_in)
        tm = tile_budget // max(1, per_row)
        row_cap = 8192 if big_vmem else 2048
        tm = max(sub, min(row_cap, tm))
    # Guarantee >= 2 grid steps for non-trivial M so the "parallel" axis can shard
    # across both TensorCores on v7x (harmless elsewhere: one extra ~0.35us step).
    if M > 2 * sub:
        tm = min(tm, _round_up(pl.cdiv(M, 2), sub))
    tm = min(tm, _round_up(M, sub))  # don't over-tile tiny inputs
    tm = _round_up(max(tm, sub), sub)

    grid_m = pl.cdiv(M, tm)  # partial last block handled by Pallas (no wrapper padding)

    bd2 = bd.reshape(1, hidden)
    bu2 = bu.reshape(1, c_in)

    # Size vmem_limit_bytes to the actual footprint: double-buffered x/out tiles, fp32
    # intermediates, and weights/biases (single- or double-buffered per the probe).
    # TODO(synk): very large c_in/hidden (weights >> VMEM) would need feature-dim tiling.
    w_bytes = ((hidden * c_in + hidden) * jnp.dtype(wd.dtype).itemsize
               + (c_in * hidden + c_in) * jnp.dtype(wu.dtype).itemsize)
    w_bufs = 1 if _SINGLE_BUFFER_WEIGHTS else 2
    need = (4 * tm * c_in * itemsize        # x + out tiles, double-buffered
            + 4 * tm * (hidden + c_in)      # fp32 h + fp32 output accumulator
            + w_bufs * w_bytes)
    headroom_cap = min(_VMEM_CAPACITY - (16 << 20), 96 << 20)  # ~48 MiB cap on v7x
    vmem_limit = max(32 << 20, min(int(need * 1.5) + (4 << 20), headroom_cap))

    out = _adapter_call(x2, wd, bd2, wu, bu2, tm=tm, grid_m=grid_m,
                        vmem_limit=vmem_limit,
                        single_buffer_weights=_SINGLE_BUFFER_WEIGHTS)
    return out.reshape(orig_shape)


def _reference(x, wd, bd, wu, bu):
    return jnp.maximum(x @ wd.T + bd, 0.0) @ wu.T + bu


if __name__ == "__main__":
    # Module config: Adapter(c_in=32, reduction=4) -> hidden = 8
    c_in = 32
    reduction = 4
    hidden = c_in // reduction
    batch, seq = 2, 8

    key = jax.random.PRNGKey(0)
    kx, kx2, kwd, kwu = jax.random.split(key, 4)

    # Deterministic parameters matching the PyTorch __init__: weights ~ N(0, 0.02), biases = 0.
    x = jax.random.normal(kx, (batch, seq, c_in), dtype=jnp.float32)
    wd = 0.02 * jax.random.normal(kwd, (hidden, c_in), dtype=jnp.float32)   # down_proj.weight
    bd = jnp.zeros((hidden,), dtype=jnp.float32)                            # down_proj.bias
    wu = 0.02 * jax.random.normal(kwu, (c_in, hidden), dtype=jnp.float32)   # up_proj.weight
    bu = jnp.zeros((c_in,), dtype=jnp.float32)                              # up_proj.bias

    # Case 1: divisible M
    out = adapter_forward(x, wd, bd, wu, bu)
    jax.block_until_ready(out)
    ref = _reference(x, wd, bd, wu, bu)
    assert out.shape == x.shape
    assert jnp.allclose(out, ref, atol=1e-5, rtol=1e-5), "mismatch vs reference (case 1)"

    # Case 2: ragged M (exercises the partial last block without wrapper-side padding)
    x_ragged = jax.random.normal(kx2, (3, 5, c_in), dtype=jnp.float32)
    out2 = adapter_forward(x_ragged, wd, bd, wu, bu)
    jax.block_until_ready(out2)
    ref2 = _reference(x_ragged, wd, bd, wu, bu)
    assert out2.shape == x_ragged.shape
    assert jnp.allclose(out2, ref2, atol=1e-5, rtol=1e-5), "mismatch vs reference (case 2)"

    # Case 3: bf16 path (matmul operands stay bf16 -> native MXU; fp32 accumulation)
    xb = x.astype(jnp.bfloat16)
    out3 = adapter_forward(xb, wd.astype(jnp.bfloat16), bd.astype(jnp.bfloat16),
                           wu.astype(jnp.bfloat16), bu.astype(jnp.bfloat16))
    jax.block_until_ready(out3)
    ref3 = _reference(xb.astype(jnp.float32), wd, bd, wu, bu)
    assert out3.shape == x.shape
    assert jnp.allclose(out3.astype(jnp.float32), ref3, atol=2e-2, rtol=2e-2), \
        "mismatch vs reference (case 3, bf16)"

    print("KERNEL_OK")
</pallas_src>

<mosaic_0001>
module attributes {stable_mosaic.version = 11 : i64} {
  func.func @k(%arg0: i32, %arg1: memref<8x128xf32, #tpu.memory_space<vmem>>, %arg2: memref<8x128xf32, #tpu.memory_space<vmem>>, %arg3: memref<8x128xf32, #tpu.memory_space<vmem>>) attributes {dimension_semantics = [#tpu.dimension_semantics<arbitrary>], iteration_bounds = array<i64: 2>, scalar_prefetch = 0 : i64, scratch_operands = 0 : i64, tpu.core_type = #tpu.core_type<tc>, window_params = [{transform_indices = @transform_0, window_bounds = array<i64: 8, 128>}, {pipeline_mode = #tpu.pipeline_mode<synchronous>, transform_indices = @transform_1, window_bounds = array<i64: 8, 128>}, {transform_indices = @transform_2, window_bounds = array<i64: 8, 128>}]} {
    %c0 = arith.constant 0 : index
    %c0_0 = arith.constant 0 : index
    %0 = vector.load %arg1[%c0, %c0_0] : memref<8x128xf32, #tpu.memory_space<vmem>>, vector<8x128xf32>
    %c0_1 = arith.constant 0 : index
    %c0_2 = arith.constant 0 : index
    %1 = vector.load %arg2[%c0_1, %c0_2] : memref<8x128xf32, #tpu.memory_space<vmem>>, vector<8x128xf32>
    %2 = arith.addf %0, %1 : vector<8x128xf32>
    %c0_3 = arith.constant 0 : index
    %c0_4 = arith.constant 0 : index
    %3 = vector.load %arg3[%c0_3, %c0_4] : memref<8x128xf32, #tpu.memory_space<vmem>>, vector<8x128xf32>
    tpu.vector_store %arg3[%c0_3, %c0_4], %2 {strides = array<i32>} : memref<8x128xf32, #tpu.memory_space<vmem>>, vector<8x128xf32>,
    return
  }
  func.func @transform_0(%arg0: i32) -> (i32, i32) {
    %c0_i32 = arith.constant 0 : i32
    %c0_i32_0 = arith.constant 0 : i32
    return %arg0, %c0_i32 : i32, i32
  }
  func.func @transform_1(%arg0: i32) -> (i32, i32) {
    %c0_i32 = arith.constant 0 : i32
    %c0_i32_0 = arith.constant 0 : i32
    %c0_i32_1 = arith.constant 0 : i32
    return %c0_i32, %c0_i32_0 : i32, i32
  }
  func.func @transform_2(%arg0: i32) -> (i32, i32) {
    %c0_i32 = arith.constant 0 : i32
    %c0_i32_0 = arith.constant 0 : i32
    return %arg0, %c0_i32 : i32, i32
  }
}

module attributes {stable_mosaic.version = 11 : i64} {
  func.func @adapter_kernel(%arg0: i32, %arg1: memref<16x32xf32, #tpu.memory_space<vmem>>, %arg2: memref<8x32xf32, #tpu.memory_space<vmem>>, %arg3: memref<1x8xf32, #tpu.memory_space<vmem>>, %arg4: memref<32x8xf32, #tpu.memory_space<vmem>>, %arg5: memref<1x32xf32, #tpu.memory_space<vmem>>, %arg6: memref<16x32xf32, #tpu.memory_space<vmem>>) attributes {dimension_semantics = [#tpu.dimension_semantics<parallel>], iteration_bounds = array<i64: 1>, scalar_prefetch = 0 : i64, scratch_operands = 0 : i64, tpu.core_type = #tpu.core_type<tc>, window_params = [{transform_indices = @transform_0, window_bounds = array<i64: 16, 32>}, {pipeline_mode = #tpu.pipeline_mode<synchronous>, transform_indices = @transform_1, window_bounds = array<i64: 8, 32>}, {pipeline_mode = #tpu.pipeline_mode<synchronous>, transform_indices = @transform_2, window_bounds = array<i64: 1, 8>}, {pipeline_mode = #tpu.pipeline_mode<synchronous>, transform_indices = @transform_3, window_bounds = array<i64: 32, 8>}, {pipeline_mode = #tpu.pipeline_mode<synchronous>, transform_indices = @transform_4, window_bounds = array<i64: 1, 32>}, {transform_indices = @transform_5, window_bounds = array<i64: 16, 32>}]} {
    %c0 = arith.constant 0 : index
    %c0_0 = arith.constant 0 : index
    %0 = vector.load %arg1[%c0, %c0_0] : memref<16x32xf32, #tpu.memory_space<vmem>>, vector<16x32xf32>
    %c0_1 = arith.constant 0 : index
    %c0_2 = arith.constant 0 : index
    %1 = vector.load %arg2[%c0_1, %c0_2] : memref<8x32xf32, #tpu.memory_space<vmem>>, vector<8x32xf32>
    %cst = arith.constant dense<0.000000e+00> : vector<16x8xf32>
    %2 = tpu.matmul %0, %1, %cst {dimension_numbers = #tpu.dot_dimension_numbers<[1], [1], [0], [0], [0, 0, 1, 0], [], []>} : vector<16x32xf32>, vector<8x32xf32>, vector<16x8xf32> -> vector<16x8xf32>
    %c0_3 = arith.constant 0 : index
    %c0_4 = arith.constant 0 : index
    %3 = vector.load %arg3[%c0_3, %c0_4] : memref<1x8xf32, #tpu.memory_space<vmem>>, vector<1x8xf32>
    %4 = vector.broadcast %3 : vector<1x8xf32> to vector<16x8xf32>
    %5 = arith.addf %2, %4 : vector<16x8xf32>
    %cst_5 = arith.constant 0.000000e+00 : f32
    %6 = vector.broadcast %cst_5 : f32 to vector<16x8xf32>
    %7 = arith.maximumf %5, %6 : vector<16x8xf32>
    %c0_6 = arith.constant 0 : index
    %c0_7 = arith.constant 0 : index
    %8 = vector.load %arg4[%c0_6, %c0_7] : memref<32x8xf32, #tpu.memory_space<vmem>>, vector<32x8xf32>
    %cst_8 = arith.constant dense<0.000000e+00> : vector<16x32xf32>
    %9 = tpu.matmul %7, %8, %cst_8 {dimension_numbers = #tpu.dot_dimension_numbers<[1], [1], [0], [0], [0, 0, 1, 0], [], []>} : vector<16x8xf32>, vector<32x8xf32>, vector<16x32xf32> -> vector<16x32xf32>
    %c0_9 = arith.constant 0 : index
    %c0_10 = arith.constant 0 : index
    %10 = vector.load %arg5[%c0_9, %c0_10] : memref<1x32xf32, #tpu.memory_space<vmem>>, vector<1x32xf32>
    %11 = vector.broadcast %10 : vector<1x32xf32> to vector<16x32xf32>
    %12 = arith.addf %9, %11 : vector<16x32xf32>
    %c0_11 = arith.constant 0 : index
    %c0_12 = arith.constant 0 : index
    %13 = vector.load %arg6[%c0_11, %c0_12] : memref<16x32xf32, #tpu.memory_space<vmem>>, vector<16x32xf32>
    tpu.vector_store %arg6[%c0_11, %c0_12], %12 {strides = array<i32>} : memref<16x32xf32, #tpu.memory_space<vmem>>, vector<16x32xf32>,
    return
  }
  func.func @transform_0(%arg0: i32) -> (i32, i32) {
    %c0_i32 = arith.constant 0 : i32
    %c0_i32_0 = arith.constant 0 : i32
    return %arg0, %c0_i32 : i32, i32
  }
  func.func @transform_1(%arg0: i32) -> (i32, i32) {
    %c0_i32 = arith.constant 0 : i32
    %c0_i32_0 = arith.constant 0 : i32
    %c0_i32_1 = arith.constant 0 : i32
    return %c0_i32, %c0_i32_0 : i32, i32
  }
  func.func @transform_2(%arg0: i32) -> (i32, i32) {
    %c0_i32 = arith.constant 0 : i32
    %c0_i32_0 = arith.constant 0 : i32
    %c0_i32_1 = arith.constant 0 : i32
    return %c0_i32, %c0_i32_0 : i32, i32
  }
  func.func @transform_3(%arg0: i32) -> (i32, i32) {
    %c0_i32 = arith.constant 0 : i32
    %c0_i32_0 = arith.constant 0 : i32
    %c0_i32_1 = arith.constant 0 : i32
    return %c0_i32, %c0_i32_0 : i32, i32
  }
  func.func @transform_4(%arg0: i32) -> (i32, i32) {
    %c0_i32 = arith.constant 0 : i32
    %c0_i32_0 = arith.constant 0 : i32
    %c0_i32_1 = arith.constant 0 : i32
    return %c0_i32, %c0_i32_0 : i32, i32
  }
  func.func @transform_5(%arg0: i32) -> (i32, i32) {
    %c0_i32 = arith.constant 0 : i32
    %c0_i32_0 = arith.constant 0 : i32
    return %arg0, %c0_i32 : i32, i32
  }
}

</mosaic_0001>

<llo_original>
// kernel: tpu_custom_call.1
$region0: #{tpu_custom_call.1}
  #allocation0 [shape = 'u32[]', space=smem, size = 0x4, offset = 0x4, fixed_abs, tag = 'smem constant byte address 0x4 - core index']
  #allocation1 [shape = 'u32[72,128]{1,0:T(1,128)}', space=vmem, size = 0x9000, scoped, tag = 'internal scratch']
  %s0 = inlined_call_operand.hbm [shape: f32[16,128], index: 0, kind: input, shape index: {}]
  %s1 = inlined_call_operand.hbm [shape: f32[8,128], index: 1, kind: input, shape index: {}]
  %s2 = inlined_call_operand.hbm [shape: f32[16,128], index: 2, kind: output, shape index: {}]
  %s3 = sld [smem:[#allocation0]]
  $region49: #{tpu_custom_call.1} parent=0
    _
  %s5 = ssub.s32 1, %s3
  %s6 = scalar_select 0, %s5, %s3
  $region1: #{tpu_custom_call.1} parent=0
    #allocation2 [shape = 'u8[8192]{0}', space=vmem, size = 0x2000, scoped, tag = 'input window, operand 0']
    #allocation3 [shape = 's32[2]{0}', space=sflag, size = 0x8, scoped, tag = 'scoped memory for tpu_custom_call.1']
    #allocation4 [shape = 's32[2]{0}', space=sflag, size = 0x8, scoped, tag = 'scoped memory for tpu_custom_call.1']
    #allocation5 [shape = 'u8[4096]{0}', space=vmem, size = 0x1000, scoped, tag = 'input window, operand 1, single buffered']
    #allocation6 [shape = 's32[1]{0}', space=sflag, size = 0x4, scoped, tag = 'scoped memory for tpu_custom_call.1']
    #allocation7 [shape = 'u8[8192]{0}', space=vmem, size = 0x2000, scoped, tag = 'output window, operand 0']
    %7 = vsyncpa [#allocation3], 0
    %s8 = scalar_lea.sflag [#allocation3], 1
    %9 = vsyncpa %s8, 0
    %10 = vsyncpa [#allocation6], 0
    %11 = vsyncpa [#allocation4], 0
    %s12 = scalar_lea.sflag [#allocation4], 1
    %13 = vsyncpa %s12, 0
    loop: start=0, step=1, limit=4
    $region2: #{tpu_custom_call.1} parent=1 // loop_pre_header
      _
    $region3: #{tpu_custom_call.1} parent=1 // loop_header
      %s15 = sphi 0, %s19
      %p16 = scmp.ge.s32.totalorder %s15, 4
      %s25 = sphi 0, %s27
      %s28 = sphi 0, %s25
      %s29 = sphi 0, %s28
      %s45 = sphi 0, %s29
      %s49 = sphi 0, %s49
      %s51 = sphi 0, %s49
      %s52 = sphi 0, %s51
      %s66 = sphi 0, %s52
      %s72 = sphi 0, %s74
      %s75 = sphi 0, %s72
      %s76 = sphi 0, %s75
      %s92 = sphi 0, %s76
    $region4: #{tpu_custom_call.1} parent=1 // loop_header_branch
      %18 = sbr.rel (%p16) target = $region8
    $region5: #{tpu_custom_call.1} parent=1 // loop_body
      %s20 = ssub.s32 %s15, 1
      %s21 = ssub.s32 %s15, 2
      %s22 = sadd.s32 %s15, 1
      %s23 = ssub.s32 %s15, %s22
      %p24 = scmp.eq.s32.totalorder %s23, 0
      %s26 = sadd.s32 %s25, 1
      %s27 = scalar_select %p24, %s25, %s26
      %p30 = pneg %p24
      %p31 = scmp.eq.s32.totalorder %s15, 1
      %p32 = por %p30, %p31
      %p33 = scmp.ne.s32.totalorder %s25, %s28
      %p34 = scmp.eq.s32.totalorder %s15, 0
      %p35 = por %p33, %p34
      %p36 = scmp.ne.s32.totalorder %s25, %s28
      %p37 = scmp.eq.s32.totalorder %s20, 1
      %p38 = por %p36, %p37
      %p39 = scmp.ne.s32.totalorder %s28, %s29
      %p40 = scmp.eq.s32.totalorder %s20, 0
      %p41 = por %p39, %p40
      %p42 = scmp.ne.s32.totalorder %s28, %s29
      %p43 = scmp.eq.s32.totalorder %s21, 1
      %p44 = por %p42, %p43
      %p46 = scmp.ne.s32.totalorder %s29, %s45
      %p47 = scmp.eq.s32.totalorder %s21, 0
      %p48 = por %p46, %p47
      %s50 = sadd.s32 %s49, 1
      %p53 = scmp.eq.s32.totalorder %s15, 1
      %p54 = scmp.ne.s32.totalorder %s49, %s51
      %p55 = scmp.eq.s32.totalorder %s15, 0
      %p56 = por %p54, %p55
      %p57 = scmp.ne.s32.totalorder %s49, %s51
      %p58 = scmp.eq.s32.totalorder %s20, 1
      %p59 = por %p57, %p58
      %p60 = scmp.ne.s32.totalorder %s51, %s52
      %p61 = scmp.eq.s32.totalorder %s20, 0
      %p62 = por %p60, %p61
      %p63 = scmp.ne.s32.totalorder %s51, %s52
      %p64 = scmp.eq.s32.totalorder %s21, 1
      %p65 = por %p63, %p64
      %p67 = scmp.ne.s32.totalorder %s52, %s66
      %p68 = scmp.eq.s32.totalorder %s21, 0
      %p69 = por %p67, %p68
      %s70 = ssub.s32 %s15, %s22
      %p71 = scmp.eq.s32.totalorder %s70, 0
      %s73 = sadd.s32 %s72, 1
      %s74 = scalar_select %p71, %s72, %s73
      %p77 = pneg %p71
      %p78 = scmp.eq.s32.totalorder %s15, 1
      %p79 = por %p77, %p78
      %p80 = scmp.ne.s32.totalorder %s72, %s75
      %p81 = scmp.eq.s32.totalorder %s15, 0
      %p82 = por %p80, %p81
      %p83 = scmp.ne.s32.totalorder %s72, %s75
      %p84 = scmp.eq.s32.totalorder %s20, 1
      %p85 = por %p83, %p84
      %p86 = scmp.ne.s32.totalorder %s75, %s76
      %p87 = scmp.eq.s32.totalorder %s20, 0
      %p88 = por %p86, %p87
      %p89 = scmp.ne.s32.totalorder %s75, %s76
      %p90 = scmp.eq.s32.totalorder %s21, 1
      %p91 = por %p89, %p90
      %p93 = scmp.ne.s32.totalorder %s76, %s92
      %p94 = scmp.eq.s32.totalorder %s21, 0
      %p95 = por %p93, %p94
      %p96 = scmp.le.s32.totalorder 1, %s15
      %p97 = scmp.lt.s32.totalorder %s15, 3
      %p98 = pnand %p96, %p97
      %p99 = pneg %p98
      // Predicated region
      $region9: #{tpu_custom_call.1} parent=5 // pred_check
        _
      $region10: #{tpu_custom_call.1} parent=5 // pred_check_branch
        %101 = sbr.rel (%p98) target = $region12
      $region11: #{tpu_custom_call.1} parent=5 // pred_region
        %s102 = ssub.s32 %s15, 1
        // Predicated region
        $region13: #{tpu_custom_call.1} parent=11 // pred_check
          %p103 = pneg %p62
        $region14: #{tpu_custom_call.1} parent=11 // pred_check_branch
          %105 = sbr.rel (%p103) target = $region16
        $region15: #{tpu_custom_call.1} parent=11 // pred_region
          %107 = vsyncadd [#allocation6], 0
          %s109 = sshll.u32 %s1, 4
          %s110 = int_to_ptr.hbm [resolvable:$true] %s109
          %s111 = sshll.u32 [#allocation5], 4
          %s112 = int_to_ptr.vmem [resolvable:$true] %s111
          %114 = dma.hbm_to_vmem [thread:$0]  %s110, 128, %s112, [#allocation6]
        $region16: #{tpu_custom_call.1} parent=11 // pred_fallthru
          _
      $region12: #{tpu_custom_call.1} parent=5 // pred_fallthru
        _
      %p115 = scmp.lt.s32.totalorder %s15, 2
      // Predicated region
      $region17: #{tpu_custom_call.1} parent=5 // pred_check
        %p116 = pneg %p115
      $region18: #{tpu_custom_call.1} parent=5 // pred_check_branch
        %118 = sbr.rel (%p116) target = $region20
      $region19: #{tpu_custom_call.1} parent=5 // pred_region
        // Predicated region
        $region21: #{tpu_custom_call.1} parent=19 // pred_check
          %p119 = pneg %p35
        $region22: #{tpu_custom_call.1} parent=19 // pred_check_branch
          %121 = sbr.rel (%p119) target = $region24
        $region23: #{tpu_custom_call.1} parent=19 // pred_region
          %s122 = sand.u32 %s25, 1
          %s123 = scalar_lea.sflag [#allocation3], %s122
          %s124 = sand.u32 %s25, 1
          %s125 = smul.addr %s124, 8
          %s126 = scalar_lea.vmem [#allocation2], %s125
          %128 = vsyncadd %s123, 0
          %s129 = smul.addr %s15, 8
          %s130 = scalar_lea.hbm %s0, %s129
          %s132 = sshll.u32 %s130, 4
          %s133 = int_to_ptr.hbm [resolvable:$true] %s132
          %s134 = sshll.u32 %s126, 4
          %s135 = int_to_ptr.vmem [resolvable:$true] %s134
          %137 = dma.hbm_to_vmem [thread:$0]  %s133, 128, %s135, %s123
        $region24: #{tpu_custom_call.1} parent=19 // pred_fallthru
          _
      $region20: #{tpu_custom_call.1} parent=5 // pred_fallthru
        _
      %p138 = scmp.le.s32.totalorder 1, %s15
      %p139 = scmp.lt.s32.totalorder %s15, 3
      %p140 = pnand %p138, %p139
      %p141 = pneg %p140
      // Predicated region
      $region25: #{tpu_custom_call.1} parent=5 // pred_check
        _
      $region26: #{tpu_custom_call.1} parent=5 // pred_check_branch
        %143 = sbr.rel (%p140) target = $region28
      $region27: #{tpu_custom_call.1} parent=5 // pred_region
        %s144 = ssub.s32 %s15, 1
        %s145 = sand.u32 %s28, 1
        %s146 = scalar_lea.sflag [#allocation3], %s145
        %s147 = sand.u32 %s28, 1
        %s148 = smul.addr %s147, 8
        %s149 = scalar_lea.vmem [#allocation2], %s148
        // Predicated region
        $region29: #{tpu_custom_call.1} parent=27 // pred_check
          %p150 = pneg %p41
        $region30: #{tpu_custom_call.1} parent=27 // pred_check_branch
          %152 = sbr.rel (%p150) target = $region32
        $region31: #{tpu_custom_call.1} parent=27 // pred_region
          %154 = dma.done %s146, 128
        $region32: #{tpu_custom_call.1} parent=27 // pred_fallthru
          _
        // Predicated region
        $region33: #{tpu_custom_call.1} parent=27 // pred_check
          %p155 = pneg %p62
        $region34: #{tpu_custom_call.1} parent=27 // pred_check_branch
          %157 = sbr.rel (%p155) target = $region36
        $region35: #{tpu_custom_call.1} parent=27 // pred_region
          %159 = dma.done [#allocation6], 128
        $region36: #{tpu_custom_call.1} parent=27 // pred_fallthru
          _
        %s160 = sand.u32 %s28, 1
        %s161 = scalar_lea.sflag [#allocation3], %s160
        %s162 = sand.u32 %s28, 1
        %s163 = smul.addr %s162, 8
        %s164 = scalar_lea.vmem [#allocation2], %s163
        %p165 = pneg %p41
        %p166 = pneg %p38
        %p167 = pneg %p62
        %p168 = pneg %p59
        %p169 = pneg %p88
        %p170 = pneg %p85
        %s171 = sand.u32 %s75, 1
        %s172 = scalar_lea.sflag [#allocation4], %s171
        %s173 = sand.u32 %s75, 1
        %s174 = smul.addr %s173, 8
        %s175 = scalar_lea.vmem [#allocation7], %s174
        %v176 = vld [vmem:[%s149] sm:$0xff]
        %v177 = vld [vmem:[#allocation5] sm:$0xff]
        %v178 = vadd.f32 %v176, %v177
        %179 = vst [vmem:[%s175] sm:$0xff] %v178
        %s180 = sand.u32 %s75, 1
        %s181 = scalar_lea.sflag [#allocation4], %s180
        %s182 = sand.u32 %s75, 1
        %s183 = smul.addr %s182, 8
        %s184 = scalar_lea.vmem [#allocation7], %s183
        // Predicated region
        $region37: #{tpu_custom_call.1} parent=27 // pred_check
          %p185 = pneg %p85
        $region38: #{tpu_custom_call.1} parent=27 // pred_check_branch
          %187 = sbr.rel (%p185) target = $region40
        $region39: #{tpu_custom_call.1} parent=27 // pred_region
          %189 = vsyncadd %s181, 0
          %s190 = smul.addr %s20, 8
          %s191 = scalar_lea.hbm %s2, %s190
          %s193 = sshll.u32 %s184, 4
          %s194 = int_to_ptr.vmem [resolvable:$true] %s193
          %s195 = sshll.u32 %s191, 4
          %s196 = int_to_ptr.hbm [resolvable:$true] %s195
          %198 = dma.vmem_to_hbm [thread:$0]  %s194, 128, %s196, %s181
        $region40: #{tpu_custom_call.1} parent=27 // pred_fallthru
          _
      $region28: #{tpu_custom_call.1} parent=5 // pred_fallthru
        _
      %p199 = scmp.le.s32.totalorder 2, %s15
      // Predicated region
      $region41: #{tpu_custom_call.1} parent=5 // pred_check
        %p200 = pneg %p199
      $region42: #{tpu_custom_call.1} parent=5 // pred_check_branch
        %202 = sbr.rel (%p200) target = $region44
      $region43: #{tpu_custom_call.1} parent=5 // pred_region
        %s203 = ssub.s32 %s15, 2
        // Predicated region
        $region45: #{tpu_custom_call.1} parent=43 // pred_check
          %p204 = pneg %p91
        $region46: #{tpu_custom_call.1} parent=43 // pred_check_branch
          %206 = sbr.rel (%p204) target = $region48
        $region47: #{tpu_custom_call.1} parent=43 // pred_region
          %s207 = sand.u32 %s76, 1
          %s208 = scalar_lea.sflag [#allocation4], %s207
          %s209 = sand.u32 %s76, 1
          %s210 = smul.addr %s209, 8
          %s211 = scalar_lea.vmem [#allocation7], %s210
          %213 = dma.done %s208, 128
        $region48: #{tpu_custom_call.1} parent=43 // pred_fallthru
          _
      $region44: #{tpu_custom_call.1} parent=5 // pred_fallthru
        _
    $region6: #{tpu_custom_call.1} parent=1 // loop_footer
      %s19 = sadd.s32 1, %s15
    $region7: #{tpu_custom_call.1} parent=1 // loop_footer_branch
      %14 = sbr.rel target = $region3
    $region8: #{tpu_custom_call.1} parent=1 // loop_exit
      _
    %214 = vsyncpa [#allocation3], 1
    %s215 = scalar_lea.sflag [#allocation3], 1
    %216 = vsyncpa %s215, 1
    %217 = vsyncpa [#allocation6], 1
    %218 = vsyncpa [#allocation4], 1
    %s219 = scalar_lea.sflag [#allocation4], 1
    %220 = vsyncpa %s219, 1

// kernel: adapter_forward.1
$region0: #{adapter_forward.1}
  #allocation0 [shape = 'u32[]', space=smem, size = 0x4, offset = 0x4, fixed_abs, tag = 'smem constant byte address 0x4 - core index']
  #allocation1 [shape = 'u32[72,128]{1,0:T(1,128)}', space=vmem, size = 0x9000, scoped, tag = 'internal scratch']
  %s0 = inlined_call_operand.vmem [shape: f32[16,32], index: 0, kind: input, shape index: {}]
  %s1 = inlined_call_operand.vmem [shape: f32[8,32], index: 1, kind: input, shape index: {}]
  %s2 = inlined_call_operand.vmem [shape: f32[1,8], index: 2, kind: input, shape index: {}]
  %s3 = inlined_call_operand.vmem [shape: f32[32,8], index: 3, kind: input, shape index: {}]
  %s4 = inlined_call_operand.vmem [shape: f32[1,32], index: 4, kind: input, shape index: {}]
  %s5 = inlined_call_operand.hbm [shape: f32[16,32], index: 5, kind: output, shape index: {}]
  %s6 = sld [smem:[#allocation0]]
  $region30: #{adapter_forward.1} parent=0
    _
  %s8 = ssub.s32 1, %s6
  %s9 = scalar_select 0, %s8, %s6
  $region1: #{adapter_forward.1} parent=0
    #allocation2 [shape = 'u8[8192]{0}', space=vmem, size = 0x2000, scoped, tag = 'output window, operand 0, single buffered']
    #allocation3 [shape = 's32[1]{0}', space=sflag, size = 0x4, scoped, tag = 'scoped memory for adapter_forward.1']
    %10 = vsyncpa [#allocation3], 0
    // Predicated region
    $region2: #{adapter_forward.1} parent=1 // pred_check
      _
    $region3: #{adapter_forward.1} parent=1 // pred_check_branch
      %12 = sbr.rel (0) target = $region5
    $region4: #{adapter_forward.1} parent=1 // pred_region
      _
    $region5: #{adapter_forward.1} parent=1 // pred_fallthru
      _
    // Predicated region
    $region6: #{adapter_forward.1} parent=1 // pred_check
      _
    $region7: #{adapter_forward.1} parent=1 // pred_check_branch
      %14 = sbr.rel (0) target = $region9
    $region8: #{adapter_forward.1} parent=1 // pred_region
      _
    $region9: #{adapter_forward.1} parent=1 // pred_fallthru
      _
    // Predicated region
    $region10: #{adapter_forward.1} parent=1 // pred_check
      _
    $region11: #{adapter_forward.1} parent=1 // pred_check_branch
      %16 = sbr.rel (0) target = $region13
    $region12: #{adapter_forward.1} parent=1 // pred_region
      _
    $region13: #{adapter_forward.1} parent=1 // pred_fallthru
      _
    // Predicated region
    $region14: #{adapter_forward.1} parent=1 // pred_check
      _
    $region15: #{adapter_forward.1} parent=1 // pred_check_branch
      %18 = sbr.rel (0) target = $region17
    $region16: #{adapter_forward.1} parent=1 // pred_region
      _
    $region17: #{adapter_forward.1} parent=1 // pred_fallthru
      _
    // Predicated region
    $region18: #{adapter_forward.1} parent=1 // pred_check
      _
    $region19: #{adapter_forward.1} parent=1 // pred_check_branch
      %20 = sbr.rel (0) target = $region21
    $region20: #{adapter_forward.1} parent=1 // pred_region
      _
    $region21: #{adapter_forward.1} parent=1 // pred_fallthru
      _
    %v21 = vld [vmem:[%s0] sm:$0xff]
    %v22 = vld [vmem:[%s0 + $0x8] sm:$0xff]
    %v23 = vld [vmem:[%s1] sm:$0xff]
    %v24 = vld [vmem:[%s2] sm:$0x1]
    %v26 = vperm.slane %v24, 0
    %vm28 = vcmask 261120
    %v30 = vsel %vm28, %v21, 0
    %v33 = vsel %vm28, %v22, 0
    %v36 = vsel %vm28, %v23, 0
    %38 = vmatpush.xpose.msra.mxu0 0.0
    %39 = vmatpush.xpose.msra.mxu0 0.0
    %40 = vmatpush.xpose.msra.mxu0 0.0
    %41 = vmatpush.xpose.msra.mxu0 0.0
    %42 = vmatpush.xpose.msra.mxu0 0.0
    %43 = vmatpush.xpose.msra.mxu0 0.0
    %44 = vmatpush.xpose.msra.mxu0 0.0
    %45 = vmatpush.xpose.msra.mxu0 0.0
    %46 = vmatpush.xpose.msra.mxu0 0.0
    %47 = vmatpush.xpose.msra.mxu0 0.0
    %48 = vmatpush.xpose.msra.mxu0 0.0
    %49 = vmatpush.xpose.msra.mxu0 0.0
    %50 = vmatpush.xpose.msra.mxu0 0.0
    %51 = vmatpush.xpose.msra.mxu0 0.0
    %52 = vmatpush.xpose.msra.mxu0 0.0
    %53 = vmatpush.xpose.msra.mxu0 %v36
    %54 = vmatmul.f32.gmra.mxu0 %v30
    %v55 = vpop.f32.mrf.mxu0
    %v56 = vadd.f32 %v26, %v55
    %57 = vmatmul.f32.gmra.mxu0 %v33
    %v58 = vpop.f32.mrf.mxu0
    %v59 = vadd.f32 %v26, %v58
    %60 = vdwg.mxu0
    %v61 = vmax.f32 %v56, 0.0
    %v62 = vmax.f32 %v59, 0.0
    %v63 = vld [vmem:[%s3] sm:$0xff]
    %v64 = vld [vmem:[%s3 + $0x8] sm:$0xff]
    %v65 = vld [vmem:[%s3 + $0x10] sm:$0xff]
    %v66 = vld [vmem:[%s3 + $0x18] sm:$0xff]
    %v67 = vld [vmem:[%s4] sm:$0x1]
    %v69 = vperm.slane %v67, 0
    %vm71 = vcmask 64512
    %v73 = vsel %vm71, %v61, 0
    %v76 = vsel %vm71, %v62, 0
    %v79 = vsel %vm71, %v63, 0
    %v82 = vsel %vm71, %v64, 0
    %v85 = vsel %vm71, %v65, 0
    %v88 = vsel %vm71, %v66, 0
    %90 = vmatpush.xpose.msra.mxu0 0.0
    %91 = vmatpush.xpose.msra.mxu0 0.0
    %92 = vmatpush.xpose.msra.mxu0 0.0
    %93 = vmatpush.xpose.msra.mxu0 0.0
    %94 = vmatpush.xpose.msra.mxu0 0.0
    %95 = vmatpush.xpose.msra.mxu0 0.0
    %96 = vmatpush.xpose.msra.mxu0 0.0
    %97 = vmatpush.xpose.msra.mxu0 0.0
    %98 = vmatpush.xpose.msra.mxu0 0.0
    %99 = vmatpush.xpose.msra.mxu0 0.0
    %100 = vmatpush.xpose.msra.mxu0 0.0
    %101 = vmatpush.xpose.msra.mxu0 0.0
    %102 = vmatpush.xpose.msra.mxu0 %v88
    %103 = vmatpush.xpose.msra.mxu0 %v85
    %104 = vmatpush.xpose.msra.mxu0 %v82
    %105 = vmatpush.xpose.msra.mxu0 %v79
    %106 = vmatmul.f32.gmra.mxu0 %v73
    %v107 = vpop.f32.mrf.mxu0
    %v108 = vadd.f32 %v69, %v107
    %109 = vmatmul.f32.gmra.mxu0 %v76
    %v110 = vpop.f32.mrf.mxu0
    %v111 = vadd.f32 %v69, %v110
    %112 = vdwg.mxu0
    %113 = vst.msk [vmem:[#allocation2] sm:$0xff] %vm28, %v108
    %114 = vst.msk [vmem:[#allocation2 + $0x8] sm:$0xff] %vm28, %v111
    // Predicated region
    $region22: #{adapter_forward.1} parent=1 // pred_check
      _
    $region23: #{adapter_forward.1} parent=1 // pred_check_branch
      %116 = sbr.rel (0) target = $region25
    $region24: #{adapter_forward.1} parent=1 // pred_region
      %118 = vsyncadd [#allocation3], 0
      %s119 = sshll.u32 [#allocation2], 4
      %s120 = int_to_ptr.vmem [resolvable:$true] %s119
      %s121 = sshll.u32 %s5, 4
      %s122 = int_to_ptr.hbm [resolvable:$true] %s121
      %127 = dma.vmem_to_hbm [thread:$0]  %s120, 256, %s122, [#allocation3], 128, 128, 8
    $region25: #{adapter_forward.1} parent=1 // pred_fallthru
      _
    // Predicated region
    $region26: #{adapter_forward.1} parent=1 // pred_check
      _
    $region27: #{adapter_forward.1} parent=1 // pred_check_branch
      %129 = sbr.rel (0) target = $region29
    $region28: #{adapter_forward.1} parent=1 // pred_region
      %131 = dma.done [#allocation3], 256
    $region29: #{adapter_forward.1} parent=1 // pred_fallthru
      _
    %132 = vsyncpa [#allocation3], 1

</llo_original>
